<compile_context>
chip_gen: v7x
topology: tpu7x:2x2x1
jax: 0.10.0
libtpu: 0.0.40
codegen_flags: <defaults>
</compile_context>

<pallas_src>
import functools

import jax
import jax.numpy as jnp
from jax import lax
from jax.experimental import pallas as pl
from jax.experimental.pallas import tpu as pltpu


# --------------------------------- kernel ------------------------------------

def _gate(x):
    # Exact reformulation of clamp(1.2*sigmoid(x) - 0.1, 0, 1): single tanh
    # (EUP), no exp/reciprocal corner cases.
    return jnp.clip(0.6 * jnp.tanh(0.5 * x) + 0.5, 0.0, 1.0)


def cgru_kernel(s_ref, w_ur_ref, b_ur_ref, w_c_ref, b_c_ref, out_ref, *,
                num_steps, cols):
    """One CGRU cell, l steps fused, state layout (C, ROWS*COLS) lane-dense.

    cols = length of the fast spatial axis (stride-1 in the flat lane index).
    Weight rows are pre-packed to match the tap order (dr, dc, ci) below.
    """
    C, HW = s_ref.shape

    # Weights / biases loaded once; resident for all num_steps iterations.
    w_ur = w_ur_ref[...]                       # (2C, 9C) bf16  (u rows, r rows)
    b_ur = b_ur_ref[...]                       # (2C, 1)  f32
    w_c = w_c_ref[...]                         # (C, 9C)  bf16
    b_c = b_c_ref[...]                         # (C, 1)   f32

    # Loop-invariant constants, built ONCE per call (hoisted out of the step
    # loop): column-validity masks for the +/-1 column taps and the zero pad
    # used to make the +/-1 row taps read zeros past either end of the state.
    lane = lax.broadcasted_iota(jnp.int32, (C, HW), 1)
    col = lane % cols
    mask_lo = (col > 0).astype(jnp.bfloat16)          # tap reads column-1
    mask_hi = (col < cols - 1).astype(jnp.bfloat16)   # tap reads column+1
    zpad = jnp.zeros((C, cols + 1), jnp.bfloat16)

    def im2col_T(xb):
        # (C, HW) bf16 -> (9C, HW) bf16 transposed patch matrix of the 3x3
        # 'same' conv.  One padded buffer, 8 shifted taps (+ the center = xb),
        # column masks only where a tap crosses a row boundary.  The 9 chunks
        # are concatenated along SUBLANES (32-row aligned) -> no lane relayout.
        xp = jnp.concatenate([zpad, xb, zpad], axis=1)     # (C, HW + 2*cols + 2)
        taps = []
        for dr in range(3):                                # slow spatial axis
            for dc in range(3):                            # fast spatial axis
                if dr == 1 and dc == 1:
                    taps.append(xb)                        # center tap, as-is
                    continue
                k = (dr - 1) * cols + (dc - 1)
                t = xp[:, cols + 1 + k: cols + 1 + k + HW]
                if dc == 0:
                    t = t * mask_lo
                elif dc == 2:
                    t = t * mask_hi
                taps.append(t)
        return jnp.concatenate(taps, axis=0)               # (9C, HW)

    s = s_ref[...]                                         # (C, HW) f32 state
    for _ in range(num_steps):     # small static l; TODO(synk): fori_loop if l grows
        # Cast once per step, BEFORE im2col (review item): all tap shifting /
        # masking / concatenation runs on half-width bf16 vregs.
        xb = s.astype(jnp.bfloat16)

        # Fused u/r gate conv: one (2C,9C)@(9C,HW) MXU matmul, bf16 in / f32 acc.
        patches = im2col_T(xb)
        ur = jnp.dot(w_ur, patches, preferred_element_type=jnp.float32) + b_ur
        u = _gate(ur[:C, :])                               # (C, HW) f32
        r = _gate(ur[C:, :])                               # (C, HW) f32

        # Reset-gated conv: one (C,9C)@(9C,HW) MXU matmul.
        rs = xb * r.astype(jnp.bfloat16)                   # bf16 before im2col
        patches_rs = im2col_T(rs)
        c_lin = jnp.dot(w_c, patches_rs, preferred_element_type=jnp.float32) + b_c

        # Blend in f32 (v5e-safe; v6e/v7x could do this phase in bf16).
        s = u * s + (1.0 - u) * jnp.tanh(c_lin)

    out_ref[...] = s                                       # lane-dense store


def cgru_call(x2d, kparams, l, cols):
    C, HW = x2d.shape
    w_ur, b_ur, w_c, b_c = kparams
    return pl.pallas_call(
        functools.partial(cgru_kernel, num_steps=l, cols=cols),
        out_shape=jax.ShapeDtypeStruct((C, HW), jnp.float32),
        in_specs=[pl.BlockSpec(memory_space=pltpu.MemorySpace.VMEM)] * 5,
        out_specs=pl.BlockSpec(memory_space=pltpu.MemorySpace.VMEM),
        input_output_aliases={0: 0},     # output reuses the input state buffer
    )(x2d, w_ur, b_ur, w_c, b_c)


def cgru_forward(s_t, kparams, l=1, depth_first=False):
    """Pallas equivalent of CGRUCell.forward.

    depth_first=False: s_t has shape (W, H, m)  (torch permute(2,1,0) -> CHW).
    depth_first=True : s_t has shape (m, H, W)  (already CHW).
    kparams must come from to_kernel_params(..., depth_first=<same flag>).
    """
    if depth_first:
        m, H, W = s_t.shape
        x2d = s_t.reshape(m, H * W).astype(jnp.float32)    # free reshape
        out2d = cgru_call(x2d, kparams, l, cols=W)
        return out2d.reshape(m, H, W)
    else:
        W, H, m = s_t.shape
        # Channels-to-front is the one layout op the lane-dense (C, H*W)
        # kernel needs; the spatial axes stay in (W, H) order (weights packed
        # (kx, ky, ci)), so no spatial transpose is done.
        x2d = jnp.transpose(s_t, (2, 0, 1)).reshape(m, W * H).astype(jnp.float32)
        out2d = cgru_call(x2d, kparams, l, cols=H)
        return jnp.transpose(out2d.reshape(m, W, H), (1, 2, 0))


# ---------------------- parameters (deterministic init) ----------------------

def init_params(key, m):
    """Same shapes / init distribution as nn.Conv2d(m, m, 3, padding=1)."""
    k = float(1.0 / (m * 3 * 3) ** 0.5)
    ks = jax.random.split(key, 6)
    w = lambda kk: jax.random.uniform(kk, (m, m, 3, 3), jnp.float32, -k, k)  # OIHW
    b = lambda kk: jax.random.uniform(kk, (m,), jnp.float32, -k, k)
    return (w(ks[0]), b(ks[1]),   # u_gate
            w(ks[2]), b(ks[3]),   # r_gate
            w(ks[4]), b(ks[5]))   # conv_r


def to_kernel_params(torch_params, depth_first=False):
    """Pack torch OIHW conv params for the transposed-GEMM, (C, HW) kernel.

    Row layout of the packed matrices is (output_channel) x (tap, ci) where
    the tap order matches the kernel's (dr, dc) loop:
      depth_first=False: flat index = w*H + h  ->  (dr, dc) = (kx, ky)
      depth_first=True : flat index = h*W + w  ->  (dr, dc) = (ky, kx)
    u/r gate weights are stacked on the output-row axis so both gates come out
    of a single MXU matmul.  Weights bf16 (MXU operands), biases f32.
    """
    wu, bu, wr, br, wc, bc = torch_params
    C = bu.shape[0]

    def pack(w_oihw):                                    # (O,I,3,3) -> (O, 9I)
        if depth_first:
            wt = jnp.transpose(w_oihw, (0, 2, 3, 1))     # (O, ky, kx, I)
        else:
            wt = jnp.transpose(w_oihw, (0, 3, 2, 1))     # (O, kx, ky, I)
        return wt.reshape(C, 9 * C)

    w_ur = jnp.concatenate([pack(wu), pack(wr)], axis=0).astype(jnp.bfloat16)
    b_ur = jnp.concatenate([bu, br]).reshape(2 * C, 1).astype(jnp.float32)
    w_c = pack(wc).astype(jnp.bfloat16)
    b_c = bc.reshape(C, 1).astype(jnp.float32)
    return (w_ur, b_ur, w_c, b_c)


# ---------------------- pure-JAX reference (for checking) --------------------

def _sigmoid_ref(x):
    return 1.0 / (1.0 + jnp.exp(-x))


def _conv2d_ref(x_chw, w_oihw, b):
    y = lax.conv_general_dilated(
        x_chw[None], w_oihw, window_strides=(1, 1), padding=((1, 1), (1, 1)),
        dimension_numbers=('NCHW', 'OIHW', 'NCHW'),
        precision=lax.Precision.HIGHEST)[0]
    return y + b[:, None, None]


def cgru_forward_ref(s_t, torch_params, l=1, depth_first=False):
    wu, bu, wr, br, wc, bc = torch_params
    s = s_t if depth_first else jnp.transpose(s_t, (2, 1, 0))
    for _ in range(l):
        u = jnp.clip(1.2 * _sigmoid_ref(_conv2d_ref(s, wu, bu)) - 0.1, 0.0, 1.0)
        r = jnp.clip(1.2 * _sigmoid_ref(_conv2d_ref(s, wr, br)) - 0.1, 0.0, 1.0)
        s = u * s + (1.0 - u) * jnp.tanh(_conv2d_ref(r * s, wc, bc))
    return s if depth_first else jnp.transpose(s, (2, 1, 0))


# ------------------------------------ main -----------------------------------

if __name__ == "__main__":
    key = jax.random.PRNGKey(0)
    pkey, xkey = jax.random.split(key)

    m, H, W = 32, 16, 16          # small, module-consistent shapes

    torch_params = init_params(pkey, m)
    kparams = to_kernel_params(torch_params, depth_first=False)

    # depth_first=False input: shape (W, H, m), as implied by permute(2,1,0)
    x = jax.random.normal(xkey, (W, H, m), jnp.float32)

    # l = 1 (module default).  Tolerance is set by the bf16 MXU operands
    # (K=288 reduction of bf16-rounded products, f32 accumulation); all other
    # math is exact f32.
    out1 = jax.block_until_ready(cgru_forward(x, kparams, l=1))
    ref1 = cgru_forward_ref(x, torch_params, l=1)
    assert out1.shape == x.shape and out1.dtype == jnp.float32
    if not jnp.allclose(out1, ref1, atol=2e-2, rtol=2e-2):
        err = float(jnp.max(jnp.abs(out1 - ref1)))
        raise AssertionError(f"Pallas kernel (l=1) mismatch, max abs err {err}")

    # l = 2 exercises the fused in-kernel recurrence (bf16 error compounds).
    out2 = jax.block_until_ready(cgru_forward(x, kparams, l=2))
    ref2 = cgru_forward_ref(x, torch_params, l=2)
    if not jnp.allclose(out2, ref2, atol=3e-2, rtol=3e-2):
        err = float(jnp.max(jnp.abs(out2 - ref2)))
        raise AssertionError(f"Pallas kernel (l=2) mismatch, max abs err {err}")

    print("KERNEL_OK")
</pallas_src>

<mosaic_0001>
module attributes {stable_mosaic.version = 11 : i64} {
  func.func @cgru_kernel(%arg0: memref<32x256xf32, #tpu.memory_space<vmem>>, %arg1: memref<64x288xbf16, #tpu.memory_space<vmem>>, %arg2: memref<64x1xf32, #tpu.memory_space<vmem>>, %arg3: memref<32x288xbf16, #tpu.memory_space<vmem>>, %arg4: memref<32x1xf32, #tpu.memory_space<vmem>>, %arg5: memref<32x256xf32, #tpu.memory_space<vmem>>) attributes {dimension_semantics = [], scalar_prefetch = 0 : i64, scratch_operands = 0 : i64, tpu.core_type = #tpu.core_type<tc>} {
    %c0 = arith.constant 0 : index
    %c0_0 = arith.constant 0 : index
    %0 = vector.load %arg1[%c0, %c0_0] : memref<64x288xbf16, #tpu.memory_space<vmem>>, vector<64x288xbf16>
    %c0_1 = arith.constant 0 : index
    %c0_2 = arith.constant 0 : index
    %1 = vector.load %arg2[%c0_1, %c0_2] : memref<64x1xf32, #tpu.memory_space<vmem>>, vector<64x1xf32>
    %c0_3 = arith.constant 0 : index
    %c0_4 = arith.constant 0 : index
    %2 = vector.load %arg3[%c0_3, %c0_4] : memref<32x288xbf16, #tpu.memory_space<vmem>>, vector<32x288xbf16>
    %c0_5 = arith.constant 0 : index
    %c0_6 = arith.constant 0 : index
    %3 = vector.load %arg4[%c0_5, %c0_6] : memref<32x1xf32, #tpu.memory_space<vmem>>, vector<32x1xf32>
    %4 = tpu.iota {dimensions = array<i32: 1>} : vector<32x256xi32>
    %c16_i32 = arith.constant 16 : i32
    %c0_i32 = arith.constant 0 : i32
    %5 = arith.cmpi eq, %c16_i32, %c0_i32 : i32
    %c1_i32 = arith.constant 1 : i32
    %6 = arith.select %5, %c1_i32, %c16_i32 : i32
    %7 = vector.broadcast %6 : i32 to vector<32x256xi32>
    %8 = arith.remsi %4, %7 : vector<32x256xi32>
    %c0_i32_7 = arith.constant 0 : i32
    %9 = vector.broadcast %c0_i32_7 : i32 to vector<32x256xi32>
    %10 = arith.cmpi ne, %8, %9 : vector<32x256xi32>
    %c0_i32_8 = arith.constant 0 : i32
    %11 = vector.broadcast %c0_i32_8 : i32 to vector<32x256xi32>
    %12 = arith.cmpi slt, %8, %11 : vector<32x256xi32>
    %c0_i32_9 = arith.constant 0 : i32
    %13 = arith.cmpi slt, %6, %c0_i32_9 : i32
    %14 = vector.broadcast %13 : i1 to vector<32x256xi1>
    %15 = vector.broadcast %14 : vector<32x256xi1> to vector<32x256xi1>
    %16 = arith.xori %12, %15 : vector<32x256xi1>
    %17 = arith.andi %16, %10 : vector<32x256xi1>
    %18 = vector.broadcast %6 : i32 to vector<32x256xi32>
    %19 = arith.addi %8, %18 : vector<32x256xi32>
    %20 = arith.select %17, %19, %8 : vector<32x256xi1>, vector<32x256xi32>
    %c0_i32_10 = arith.constant 0 : i32
    %21 = vector.broadcast %c0_i32_10 : i32 to vector<32x256xi32>
    %22 = arith.cmpi sgt, %20, %21 : vector<32x256xi32>
    %23 = arith.extui %22 : vector<32x256xi1> to vector<32x256xi32>
    %24 = arith.sitofp %23 : vector<32x256xi32> to vector<32x256xf32>
    %25 = arith.truncf %24 : vector<32x256xf32> to vector<32x256xbf16>
    %c15_i32 = arith.constant 15 : i32
    %26 = vector.broadcast %c15_i32 : i32 to vector<32x256xi32>
    %27 = arith.cmpi slt, %20, %26 : vector<32x256xi32>
    %28 = arith.extui %27 : vector<32x256xi1> to vector<32x256xi32>
    %29 = arith.sitofp %28 : vector<32x256xi32> to vector<32x256xf32>
    %30 = arith.truncf %29 : vector<32x256xf32> to vector<32x256xbf16>
    %cst = arith.constant 0.000000e+00 : bf16
    %31 = vector.broadcast %cst : bf16 to vector<32x17xbf16>
    %c0_11 = arith.constant 0 : index
    %c0_12 = arith.constant 0 : index
    %32 = vector.load %arg0[%c0_11, %c0_12] : memref<32x256xf32, #tpu.memory_space<vmem>>, vector<32x256xf32>
    %33 = arith.truncf %32 : vector<32x256xf32> to vector<32x256xbf16>
    %34 = tpu.concatenate %31, %33, %31 in 1 : vector<32x17xbf16>, vector<32x256xbf16>, vector<32x17xbf16> -> vector<32x290xbf16>
    %35 = vector.extract_strided_slice %34 {offsets = [0, 0], sizes = [32, 256], strides = [1, 1]} : vector<32x290xbf16> to vector<32x256xbf16>
    %36 = arith.mulf %35, %25 : vector<32x256xbf16>
    %37 = vector.extract_strided_slice %34 {offsets = [0, 1], sizes = [32, 256], strides = [1, 1]} : vector<32x290xbf16> to vector<32x256xbf16>
    %38 = vector.extract_strided_slice %34 {offsets = [0, 2], sizes = [32, 256], strides = [1, 1]} : vector<32x290xbf16> to vector<32x256xbf16>
    %39 = arith.mulf %38, %30 : vector<32x256xbf16>
    %40 = vector.extract_strided_slice %34 {offsets = [0, 16], sizes = [32, 256], strides = [1, 1]} : vector<32x290xbf16> to vector<32x256xbf16>
    %41 = arith.mulf %40, %25 : vector<32x256xbf16>
    %42 = vector.extract_strided_slice %34 {offsets = [0, 18], sizes = [32, 256], strides = [1, 1]} : vector<32x290xbf16> to vector<32x256xbf16>
    %43 = arith.mulf %42, %30 : vector<32x256xbf16>
    %44 = vector.extract_strided_slice %34 {offsets = [0, 32], sizes = [32, 256], strides = [1, 1]} : vector<32x290xbf16> to vector<32x256xbf16>
    %45 = arith.mulf %44, %25 : vector<32x256xbf16>
    %46 = vector.extract_strided_slice %34 {offsets = [0, 33], sizes = [32, 256], strides = [1, 1]} : vector<32x290xbf16> to vector<32x256xbf16>
    %47 = vector.extract_strided_slice %34 {offsets = [0, 34], sizes = [32, 256], strides = [1, 1]} : vector<32x290xbf16> to vector<32x256xbf16>
    %48 = arith.mulf %47, %30 : vector<32x256xbf16>
    %49 = tpu.concatenate %36, %37, %39, %41, %33, %43, %45, %46, %48 in 0 : vector<32x256xbf16>, vector<32x256xbf16>, vector<32x256xbf16>, vector<32x256xbf16>, vector<32x256xbf16>, vector<32x256xbf16>, vector<32x256xbf16>, vector<32x256xbf16>, vector<32x256xbf16> -> vector<288x256xbf16>
    %cst_13 = arith.constant dense<0.000000e+00> : vector<64x256xf32>
    %50 = tpu.matmul %0, %49, %cst_13 {dimension_numbers = #tpu.dot_dimension_numbers<[1], [0], [0], [1], [0, 0, 1, 1], [], []>} : vector<64x288xbf16>, vector<288x256xbf16>, vector<64x256xf32> -> vector<64x256xf32>
    %51 = vector.broadcast %1 : vector<64x1xf32> to vector<64x256xf32>
    %52 = arith.addf %50, %51 : vector<64x256xf32>
    %53 = vector.extract_strided_slice %52 {offsets = [0, 0], sizes = [32, 256], strides = [1, 1]} : vector<64x256xf32> to vector<32x256xf32>
    %cst_14 = arith.constant 5.000000e-01 : f32
    %54 = vector.broadcast %cst_14 : f32 to vector<32x256xf32>
    %55 = arith.mulf %54, %53 : vector<32x256xf32>
    %56 = math.tanh %55 : vector<32x256xf32>
    %cst_15 = arith.constant 6.000000e-01 : f32
    %57 = vector.broadcast %cst_15 : f32 to vector<32x256xf32>
    %58 = arith.mulf %57, %56 : vector<32x256xf32>
    %cst_16 = arith.constant 5.000000e-01 : f32
    %59 = vector.broadcast %cst_16 : f32 to vector<32x256xf32>
    %60 = arith.addf %58, %59 : vector<32x256xf32>
    %cst_17 = arith.constant 0.000000e+00 : f32
    %cst_18 = arith.constant 1.000000e+00 : f32
    %61 = vector.broadcast %cst_17 : f32 to vector<32x256xf32>
    %62 = arith.maximumf %61, %60 : vector<32x256xf32>
    %63 = vector.broadcast %cst_18 : f32 to vector<32x256xf32>
    %64 = arith.minimumf %63, %62 : vector<32x256xf32>
    %65 = vector.extract_strided_slice %52 {offsets = [32, 0], sizes = [32, 256], strides = [1, 1]} : vector<64x256xf32> to vector<32x256xf32>
    %cst_19 = arith.constant 5.000000e-01 : f32
    %66 = vector.broadcast %cst_19 : f32 to vector<32x256xf32>
    %67 = arith.mulf %66, %65 : vector<32x256xf32>
    %68 = math.tanh %67 : vector<32x256xf32>
    %cst_20 = arith.constant 6.000000e-01 : f32
    %69 = vector.broadcast %cst_20 : f32 to vector<32x256xf32>
    %70 = arith.mulf %69, %68 : vector<32x256xf32>
    %cst_21 = arith.constant 5.000000e-01 : f32
    %71 = vector.broadcast %cst_21 : f32 to vector<32x256xf32>
    %72 = arith.addf %70, %71 : vector<32x256xf32>
    %cst_22 = arith.constant 0.000000e+00 : f32
    %cst_23 = arith.constant 1.000000e+00 : f32
    %73 = vector.broadcast %cst_22 : f32 to vector<32x256xf32>
    %74 = arith.maximumf %73, %72 : vector<32x256xf32>
    %75 = vector.broadcast %cst_23 : f32 to vector<32x256xf32>
    %76 = arith.minimumf %75, %74 : vector<32x256xf32>
    %77 = arith.truncf %76 : vector<32x256xf32> to vector<32x256xbf16>
    %78 = arith.mulf %33, %77 : vector<32x256xbf16>
    %79 = tpu.concatenate %31, %78, %31 in 1 : vector<32x17xbf16>, vector<32x256xbf16>, vector<32x17xbf16> -> vector<32x290xbf16>
    %80 = vector.extract_strided_slice %79 {offsets = [0, 0], sizes = [32, 256], strides = [1, 1]} : vector<32x290xbf16> to vector<32x256xbf16>
    %81 = arith.mulf %80, %25 : vector<32x256xbf16>
    %82 = vector.extract_strided_slice %79 {offsets = [0, 1], sizes = [32, 256], strides = [1, 1]} : vector<32x290xbf16> to vector<32x256xbf16>
    %83 = vector.extract_strided_slice %79 {offsets = [0, 2], sizes = [32, 256], strides = [1, 1]} : vector<32x290xbf16> to vector<32x256xbf16>
    %84 = arith.mulf %83, %30 : vector<32x256xbf16>
    %85 = vector.extract_strided_slice %79 {offsets = [0, 16], sizes = [32, 256], strides = [1, 1]} : vector<32x290xbf16> to vector<32x256xbf16>
    %86 = arith.mulf %85, %25 : vector<32x256xbf16>
    %87 = vector.extract_strided_slice %79 {offsets = [0, 18], sizes = [32, 256], strides = [1, 1]} : vector<32x290xbf16> to vector<32x256xbf16>
    %88 = arith.mulf %87, %30 : vector<32x256xbf16>
    %89 = vector.extract_strided_slice %79 {offsets = [0, 32], sizes = [32, 256], strides = [1, 1]} : vector<32x290xbf16> to vector<32x256xbf16>
    %90 = arith.mulf %89, %25 : vector<32x256xbf16>
    %91 = vector.extract_strided_slice %79 {offsets = [0, 33], sizes = [32, 256], strides = [1, 1]} : vector<32x290xbf16> to vector<32x256xbf16>
    %92 = vector.extract_strided_slice %79 {offsets = [0, 34], sizes = [32, 256], strides = [1, 1]} : vector<32x290xbf16> to vector<32x256xbf16>
    %93 = arith.mulf %92, %30 : vector<32x256xbf16>
    %94 = tpu.concatenate %81, %82, %84, %86, %78, %88, %90, %91, %93 in 0 : vector<32x256xbf16>, vector<32x256xbf16>, vector<32x256xbf16>, vector<32x256xbf16>, vector<32x256xbf16>, vector<32x256xbf16>, vector<32x256xbf16>, vector<32x256xbf16>, vector<32x256xbf16> -> vector<288x256xbf16>
    %cst_24 = arith.constant dense<0.000000e+00> : vector<32x256xf32>
    %95 = tpu.matmul %2, %94, %cst_24 {dimension_numbers = #tpu.dot_dimension_numbers<[1], [0], [0], [1], [0, 0, 1, 1], [], []>} : vector<32x288xbf16>, vector<288x256xbf16>, vector<32x256xf32> -> vector<32x256xf32>
    %96 = vector.broadcast %3 : vector<32x1xf32> to vector<32x256xf32>
    %97 = arith.addf %95, %96 : vector<32x256xf32>
    %98 = arith.mulf %64, %32 : vector<32x256xf32>
    %cst_25 = arith.constant 1.000000e+00 : f32
    %99 = vector.broadcast %cst_25 : f32 to vector<32x256xf32>
    %100 = arith.subf %99, %64 : vector<32x256xf32>
    %101 = math.tanh %97 : vector<32x256xf32>
    %102 = arith.mulf %100, %101 : vector<32x256xf32>
    %103 = arith.addf %98, %102 : vector<32x256xf32>
    %c0_26 = arith.constant 0 : index
    %c0_27 = arith.constant 0 : index
    %104 = vector.load %arg5[%c0_26, %c0_27] : memref<32x256xf32, #tpu.memory_space<vmem>>, vector<32x256xf32>
    tpu.vector_store %arg5[%c0_26, %c0_27], %103 {strides = array<i32>} : memref<32x256xf32, #tpu.memory_space<vmem>>, vector<32x256xf32>,
    return
  }
}

</mosaic_0001>

<llo_original>
// kernel: tpu_custom_call.1
$region0: #{tpu_custom_call.1}
  #allocation0 [shape = 'u32[]', space=smem, size = 0x4, offset = 0x4, fixed_abs, tag = 'smem constant byte address 0x4 - core index']
  #allocation1 [shape = 'u32[144,128]{1,0:T(1,128)}', space=vmem, size = 0x12000, scoped, tag = 'internal scratch']
  %s0 = inlined_call_operand.hbm [shape: f32[32,256], index: 0, kind: input, shape index: {}, may-alias: {0,5}]
  %s1 = inlined_call_operand.vmem [shape: bf16[64,288], index: 1, kind: input, shape index: {}]
  %s2 = inlined_call_operand.vmem [shape: f32[64,1], index: 2, kind: input, shape index: {}]
  %s3 = inlined_call_operand.vmem [shape: bf16[32,288], index: 3, kind: input, shape index: {}]
  %s4 = inlined_call_operand.vmem [shape: f32[32,1], index: 4, kind: input, shape index: {}]
  %s5 = inlined_call_operand.hbm [shape: f32[32,256], index: 5, kind: output, shape index: {}, may-alias: {0,5}]
  %s6 = sld [smem:[#allocation0]]
  $region34: #{tpu_custom_call.1} parent=0
    _
  %s8 = ssub.s32 1, %s6
  %s9 = scalar_select 0, %s8, %s6
  $region1: #{tpu_custom_call.1} parent=0
    #allocation2 [shape = 'u8[32768]{0}', space=vmem, size = 0x8000, scoped, tag = 'input window, operand 0, single buffered']
    #allocation3 [shape = 's32[1]{0}', space=sflag, size = 0x4, scoped, tag = 'scoped memory for tpu_custom_call.1']
    #allocation4 [shape = 's32[1]{0}', space=sflag, size = 0x4, scoped, tag = 'scoped memory for tpu_custom_call.1']
    #allocation5 [shape = 'u8[32768]{0}', space=vmem, size = 0x8000, scoped, tag = 'output window, operand 0, single buffered']
    %10 = vsyncpa [#allocation3], 0
    %11 = vsyncpa [#allocation4], 0
    // Predicated region
    $region2: #{tpu_custom_call.1} parent=1 // pred_check
      _
    $region3: #{tpu_custom_call.1} parent=1 // pred_check_branch
      %13 = sbr.rel (0) target = $region5
    $region4: #{tpu_custom_call.1} parent=1 // pred_region
      %s15 = ssub.s32 1024, 1024
      %16 = vsyncadd [#allocation3], %s15
      %s17 = sshll.u32 [#allocation2], 4
      %s18 = int_to_ptr.vmem [resolvable:$true] %s17
      %23 = dma.hbm_to_vmem [thread:$0]  %s0, 1024, %s18, [#allocation3], 256, 256, 16
    $region5: #{tpu_custom_call.1} parent=1 // pred_fallthru
      _
    // Predicated region
    $region6: #{tpu_custom_call.1} parent=1 // pred_check
      _
    $region7: #{tpu_custom_call.1} parent=1 // pred_check_branch
      %25 = sbr.rel (0) target = $region9
    $region8: #{tpu_custom_call.1} parent=1 // pred_region
      _
    $region9: #{tpu_custom_call.1} parent=1 // pred_fallthru
      _
    // Predicated region
    $region10: #{tpu_custom_call.1} parent=1 // pred_check
      _
    $region11: #{tpu_custom_call.1} parent=1 // pred_check_branch
      %27 = sbr.rel (0) target = $region13
    $region12: #{tpu_custom_call.1} parent=1 // pred_region
      _
    $region13: #{tpu_custom_call.1} parent=1 // pred_fallthru
      _
    // Predicated region
    $region14: #{tpu_custom_call.1} parent=1 // pred_check
      _
    $region15: #{tpu_custom_call.1} parent=1 // pred_check_branch
      %29 = sbr.rel (0) target = $region17
    $region16: #{tpu_custom_call.1} parent=1 // pred_region
      _
    $region17: #{tpu_custom_call.1} parent=1 // pred_fallthru
      _
    // Predicated region
    $region18: #{tpu_custom_call.1} parent=1 // pred_check
      _
    $region19: #{tpu_custom_call.1} parent=1 // pred_check_branch
      %31 = sbr.rel (0) target = $region21
    $region20: #{tpu_custom_call.1} parent=1 // pred_region
      _
    $region21: #{tpu_custom_call.1} parent=1 // pred_fallthru
      _
    // Predicated region
    $region22: #{tpu_custom_call.1} parent=1 // pred_check
      _
    $region23: #{tpu_custom_call.1} parent=1 // pred_check_branch
      %33 = sbr.rel (0) target = $region25
    $region24: #{tpu_custom_call.1} parent=1 // pred_region
      %34 = dma.done [#allocation3], 1024
    $region25: #{tpu_custom_call.1} parent=1 // pred_fallthru
      _
    %v36 = vld [vmem:[%s1] sm:$0xff]
    %v37 = vld [vmem:[%s1 + $0x8] sm:$0xf]
    %v38 = vld [vmem:[%s1 + $0xc] sm:$0xff]
    %v39 = vld [vmem:[%s1 + $0x14] sm:$0xf]
    %v40 = vld [vmem:[%s1 + $0x18] sm:$0xff]
    %v41 = vld [vmem:[%s1 + $0x20] sm:$0xf]
    %v42 = vld [vmem:[%s1 + $0x24] sm:$0xff]
    %v43 = vld [vmem:[%s1 + $0x2c] sm:$0xf]
    %v44 = vld [vmem:[%s1 + $0x30] sm:$0xff]
    %v45 = vld [vmem:[%s1 + $0x38] sm:$0xf]
    %v46 = vld [vmem:[%s1 + $0x3c] sm:$0xff]
    %v47 = vld [vmem:[%s1 + $0x44] sm:$0xf]
    %v48 = vld [vmem:[%s1 + $0x48] sm:$0xff]
    %v49 = vld [vmem:[%s1 + $0x50] sm:$0xf]
    %v50 = vld [vmem:[%s1 + $0x54] sm:$0xff]
    %v51 = vld [vmem:[%s1 + $0x5c] sm:$0xf]
    %v52 = vld [vmem:[%s2] sm:$0xff]
    %v53 = vld [vmem:[%s2 + $0x8] sm:$0xff]
    %v54 = vld [vmem:[%s2 + $0x10] sm:$0xff]
    %v55 = vld [vmem:[%s2 + $0x18] sm:$0xff]
    %v56 = vld [vmem:[%s2 + $0x20] sm:$0xff]
    %v57 = vld [vmem:[%s2 + $0x28] sm:$0xff]
    %v58 = vld [vmem:[%s2 + $0x30] sm:$0xff]
    %v59 = vld [vmem:[%s2 + $0x38] sm:$0xff]
    %v60 = vld [vmem:[%s3] sm:$0xff]
    %v61 = vld [vmem:[%s3 + $0x8] sm:$0xf]
    %v62 = vld [vmem:[%s3 + $0xc] sm:$0xff]
    %v63 = vld [vmem:[%s3 + $0x14] sm:$0xf]
    %v64 = vld [vmem:[%s3 + $0x18] sm:$0xff]
    %v65 = vld [vmem:[%s3 + $0x20] sm:$0xf]
    %v66 = vld [vmem:[%s3 + $0x24] sm:$0xff]
    %v67 = vld [vmem:[%s3 + $0x2c] sm:$0xf]
    %v68 = vld [vmem:[%s4] sm:$0xff]
    %v69 = vld [vmem:[%s4 + $0x8] sm:$0xff]
    %v70 = vld [vmem:[%s4 + $0x10] sm:$0xff]
    %v71 = vld [vmem:[%s4 + $0x18] sm:$0xff]
    %v72 = vlaneseq
    %v73 = vand.u32 %v72, 127
    %v74 = vadd.s32 %v73, 128
    %vm75 = vcmp.lt.s32.totalorder %v73, 0
    %v76 = vsub.s32 0, %v73
    %v77 = vsel %vm75, %v76, %v73
    %v78 = vshrl.u32 %v77, 4
    %v79 = vand.u32 %v77, 15
    %v80 = vsub.s32 0, %v79
    %v81 = vsel %vm75, %v80, %v79
    %vm82 = vcmp.lt.s32.totalorder %v74, 0
    %v83 = vsub.s32 0, %v74
    %v84 = vsel %vm82, %v83, %v74
    %v85 = vshrl.u32 %v84, 4
    %v86 = vand.u32 %v84, 15
    %v87 = vsub.s32 0, %v86
    %v88 = vsel %vm82, %v87, %v86
    %vm89 = vcmp.ne.s32.totalorder %v81, 0
    %vm90 = vcmp.ne.s32.totalorder %v88, 0
    %vm91 = vcmp.lt.s32.totalorder %v81, 0
    %vm92 = vcmp.lt.s32.totalorder %v88, 0
    %vm93 = vmand %vm91, %vm89
    %vm94 = vmand %vm92, %vm90
    %v95 = vadd.s32 %v81, 16
    %v96 = vadd.s32 %v88, 16
    %v97 = vsel %vm93, %v95, %v81
    %v98 = vsel %vm94, %v96, %v88
    %vm99 = vcmp.gt.s32.totalorder %v97, 0
    %vm100 = vcmp.gt.s32.totalorder %v98, 0
    %v101 = vsel %vm99, 1, 0
    %v102 = vsel %vm100, 1, 0
    %v103 = vcvt.s32.f32 %v101
    %v104 = vcvt.s32.f32 %v102
    %v105 = vpack.c.bf16 %v103, %v103
    %v106 = vpack.c.bf16 %v104, %v104
    %vm107 = vcmp.lt.s32.totalorder %v97, 15
    %vm108 = vcmp.lt.s32.totalorder %v98, 15
    %v109 = vsel %vm107, 1, 0
    %v110 = vsel %vm108, 1, 0
    %v111 = vcvt.s32.f32 %v109
    %v112 = vcvt.s32.f32 %v110
    %v113 = vpack.c.bf16 %v111, %v111
    %v114 = vpack.c.bf16 %v112, %v112
    %v115 = vld [vmem:[#allocation2] sm:$0xff]
    %v116 = vld [vmem:[#allocation2 + $0x8] sm:$0xff]
    %v117 = vld [vmem:[#allocation2 + $0x10] sm:$0xff]
    %v118 = vld [vmem:[#allocation2 + $0x18] sm:$0xff]
    %v119 = vld [vmem:[#allocation2 + $0x20] sm:$0xff]
    %v120 = vld [vmem:[#allocation2 + $0x28] sm:$0xff]
    %v121 = vld [vmem:[#allocation2 + $0x30] sm:$0xff]
    %v122 = vld [vmem:[#allocation2 + $0x38] sm:$0xff]
    %v123 = vpack.c.bf16 %v117, %v115
    %v124 = vpack.c.bf16 %v118, %v116
    %v125 = vpack.c.bf16 %v121, %v119
    %v126 = vpack.c.bf16 %v122, %v120
    %131 = vrot.lane.b32.xlu0 %v123, 17
    %v132 = vpop.permute.xlu0 %131
    %133 = vrot.lane.b32.xlu0 %v124, 17
    %v134 = vpop.permute.xlu0 %133
    %135 = vrot.lane.b32.xlu0 %v125, 17
    %v136 = vpop.permute.xlu0 %135
    %137 = vrot.lane.b32.xlu0 %v126, 17
    %v138 = vpop.permute.xlu0 %137
    %vm139 = vcmask 138240
    %v140 = vsel %vm139, %v132, %v134
    %v141 = vsel %vm139, %v136, %v138
    %vm144 = vcmask 138240
    %v147 = vsel %vm144, 0, %v132
    %v150 = vsel %vm144, 0, %v136
    %v153 = vsel %vm144, %v134, 0
    %v156 = vsel %vm144, %v138, 0
    %v158 = vmul.bf16 %v147, %v105
    %v159 = vmul.bf16 %v140, %v106
    %v160 = vmul.bf16 %v150, %v105
    %v161 = vmul.bf16 %v141, %v106
    %164 = vrot.lane.b32.xlu0 %v113, 2
    %v165 = vpop.permute.xlu0 %164
    %166 = vrot.lane.b32.xlu0 %v114, 2
    %v167 = vpop.permute.xlu0 %166
    %vm168 = vcmask 15360
    %v169 = vsel %vm168, %v165, %v167
    %v173 = vmul.bf16 %v147, %v165
    %v174 = vmul.bf16 %v140, %v169
    %v175 = vmul.bf16 %v153, %v167
    %v176 = vmul.bf16 %v150, %v165
    %v177 = vmul.bf16 %v141, %v169
    %v178 = vmul.bf16 %v156, %v167
    %181 = vrot.lane.b32.xlu0 %v105, 16
    %v182 = vpop.permute.xlu0 %181
    %183 = vrot.lane.b32.xlu0 %v106, 16
    %v184 = vpop.permute.xlu0 %183
    %vm185 = vcmask 130048
    %v186 = vsel %vm185, %v182, %v184
    %v190 = vmul.bf16 %v147, %v182
    %v191 = vmul.bf16 %v140, %v186
    %v192 = vmul.bf16 %v153, %v184
    %v193 = vmul.bf16 %v150, %v182
    %v194 = vmul.bf16 %v141, %v186
    %v195 = vmul.bf16 %v156, %v184
    %196 = vrot.lane.b32.xlu0 %v113, 18
    %v197 = vpop.permute.xlu0 %196
    %198 = vrot.lane.b32.xlu0 %v114, 18
    %v199 = vpop.permute.xlu0 %198
    %vm200 = vcmask 146432
    %v201 = vsel %vm200, %v197, %v199
    %v205 = vmul.bf16 %v147, %v197
    %v206 = vmul.bf16 %v140, %v201
    %v207 = vmul.bf16 %v153, %v199
    %v208 = vmul.bf16 %v150, %v197
    %v209 = vmul.bf16 %v141, %v201
    %v210 = vmul.bf16 %v156, %v199
    %211 = vrot.lane.b32.xlu0 %v105, 32
    %v212 = vpop.permute.xlu0 %211
    %213 = vrot.lane.b32.xlu0 %v106, 32
    %v214 = vpop.permute.xlu0 %213
    %vm215 = vcmask 261120
    %v216 = vsel %vm215, %v212, %v214
    %v220 = vmul.bf16 %v147, %v212
    %v221 = vmul.bf16 %v140, %v216
    %v222 = vmul.bf16 %v153, %v214
    %v223 = vmul.bf16 %v150, %v212
    %v224 = vmul.bf16 %v141, %v216
    %v225 = vmul.bf16 %v156, %v214
    %226 = vrot.lane.b32.xlu0 %v113, 34
    %v227 = vpop.permute.xlu0 %226
    %228 = vrot.lane.b32.xlu0 %v114, 34
    %v229 = vpop.permute.xlu0 %228
    %vm230 = vcmask 277504
    %v231 = vsel %vm230, %v227, %v229
    %v235 = vmul.bf16 %v147, %v227
    %v236 = vmul.bf16 %v140, %v231
    %v237 = vmul.bf16 %v153, %v229
    %v238 = vmul.bf16 %v150, %v227
    %v239 = vmul.bf16 %v141, %v231
    %v240 = vmul.bf16 %v156, %v229
    %245 = vrot.lane.b32.xlu0 %v147, 127
    %v246 = vpop.permute.xlu0 %245
    %247 = vrot.lane.b32.xlu0 %v140, 127
    %v248 = vpop.permute.xlu0 %247
    %249 = vrot.lane.b32.xlu0 %v153, 127
    %v250 = vpop.permute.xlu0 %249
    %251 = vrot.lane.b32.xlu0 %v150, 127
    %v252 = vpop.permute.xlu0 %251
    %253 = vrot.lane.b32.xlu0 %v141, 127
    %v254 = vpop.permute.xlu0 %253
    %255 = vrot.lane.b32.xlu0 %v156, 127
    %v256 = vpop.permute.xlu0 %255
    %vm257 = vcmask 1039360
    %v258 = vsel %vm257, %v246, %v248
    %v259 = vsel %vm257, %v248, %v250
    %v260 = vsel %vm257, %v252, %v254
    %v261 = vsel %vm257, %v254, %v256
    %272 = vrot.lane.b32.xlu0 %v173, 126
    %v273 = vpop.permute.xlu0 %272
    %274 = vrot.lane.b32.xlu0 %v174, 126
    %v275 = vpop.permute.xlu0 %274
    %276 = vrot.lane.b32.xlu0 %v175, 126
    %v277 = vpop.permute.xlu0 %276
    %278 = vrot.lane.b32.xlu0 %v176, 126
    %v279 = vpop.permute.xlu0 %278
    %280 = vrot.lane.b32.xlu0 %v177, 126
    %v281 = vpop.permute.xlu0 %280
    %282 = vrot.lane.b32.xlu0 %v178, 126
    %v283 = vpop.permute.xlu0 %282
    %vm284 = vcmask 1031168
    %v285 = vsel %vm284, %v273, %v275
    %v286 = vsel %vm284, %v275, %v277
    %v287 = vsel %vm284, %v279, %v281
    %v288 = vsel %vm284, %v281, %v283
    %299 = vrot.lane.b32.xlu0 %v190, 112
    %v300 = vpop.permute.xlu0 %299
    %301 = vrot.lane.b32.xlu0 %v191, 112
    %v302 = vpop.permute.xlu0 %301
    %303 = vrot.lane.b32.xlu0 %v192, 112
    %v304 = vpop.permute.xlu0 %303
    %305 = vrot.lane.b32.xlu0 %v193, 112
    %v306 = vpop.permute.xlu0 %305
    %307 = vrot.lane.b32.xlu0 %v194, 112
    %v308 = vpop.permute.xlu0 %307
    %309 = vrot.lane.b32.xlu0 %v195, 112
    %v310 = vpop.permute.xlu0 %309
    %vm311 = vcmask 916480
    %v312 = vsel %vm311, %v300, %v302
    %v313 = vsel %vm311, %v302, %v304
    %v314 = vsel %vm311, %v306, %v308
    %v315 = vsel %vm311, %v308, %v310
    %326 = vrot.lane.b32.xlu0 %v205, 110
    %v327 = vpop.permute.xlu0 %326
    %328 = vrot.lane.b32.xlu0 %v206, 110
    %v329 = vpop.permute.xlu0 %328
    %330 = vrot.lane.b32.xlu0 %v207, 110
    %v331 = vpop.permute.xlu0 %330
    %332 = vrot.lane.b32.xlu0 %v208, 110
    %v333 = vpop.permute.xlu0 %332
    %334 = vrot.lane.b32.xlu0 %v209, 110
    %v335 = vpop.permute.xlu0 %334
    %336 = vrot.lane.b32.xlu0 %v210, 110
    %v337 = vpop.permute.xlu0 %336
    %vm338 = vcmask 900096
    %v339 = vsel %vm338, %v327, %v329
    %v340 = vsel %vm338, %v329, %v331
    %v341 = vsel %vm338, %v333, %v335
    %v342 = vsel %vm338, %v335, %v337
    %353 = vrot.lane.b32.xlu0 %v220, 96
    %v354 = vpop.permute.xlu0 %353
    %355 = vrot.lane.b32.xlu0 %v221, 96
    %v356 = vpop.permute.xlu0 %355
    %357 = vrot.lane.b32.xlu0 %v222, 96
    %v358 = vpop.permute.xlu0 %357
    %359 = vrot.lane.b32.xlu0 %v223, 96
    %v360 = vpop.permute.xlu0 %359
    %361 = vrot.lane.b32.xlu0 %v224, 96
    %v362 = vpop.permute.xlu0 %361
    %363 = vrot.lane.b32.xlu0 %v225, 96
    %v364 = vpop.permute.xlu0 %363
    %vm365 = vcmask 785408
    %v366 = vsel %vm365, %v354, %v356
    %v367 = vsel %vm365, %v356, %v358
    %v368 = vsel %vm365, %v360, %v362
    %v369 = vsel %vm365, %v362, %v364
    %374 = vrot.lane.b32.xlu0 %v147, 95
    %v375 = vpop.permute.xlu0 %374
    %376 = vrot.lane.b32.xlu0 %v140, 95
    %v377 = vpop.permute.xlu0 %376
    %378 = vrot.lane.b32.xlu0 %v153, 95
    %v379 = vpop.permute.xlu0 %378
    %380 = vrot.lane.b32.xlu0 %v150, 95
    %v381 = vpop.permute.xlu0 %380
    %382 = vrot.lane.b32.xlu0 %v141, 95
    %v383 = vpop.permute.xlu0 %382
    %384 = vrot.lane.b32.xlu0 %v156, 95
    %v385 = vpop.permute.xlu0 %384
    %vm386 = vcmask 777216
    %v387 = vsel %vm386, %v375, %v377
    %v388 = vsel %vm386, %v377, %v379
    %v389 = vsel %vm386, %v381, %v383
    %v390 = vsel %vm386, %v383, %v385
    %401 = vrot.lane.b32.xlu0 %v235, 94
    %v402 = vpop.permute.xlu0 %401
    %403 = vrot.lane.b32.xlu0 %v236, 94
    %v404 = vpop.permute.xlu0 %403
    %405 = vrot.lane.b32.xlu0 %v237, 94
    %v406 = vpop.permute.xlu0 %405
    %407 = vrot.lane.b32.xlu0 %v238, 94
    %v408 = vpop.permute.xlu0 %407
    %409 = vrot.lane.b32.xlu0 %v239, 94
    %v410 = vpop.permute.xlu0 %409
    %411 = vrot.lane.b32.xlu0 %v240, 94
    %v412 = vpop.permute.xlu0 %411
    %vm413 = vcmask 769024
    %v414 = vsel %vm413, %v402, %v404
    %v415 = vsel %vm413, %v404, %v406
    %v416 = vsel %vm413, %v408, %v410
    %v417 = vsel %vm413, %v410, %v412
    %423 = vset.pattern.permute.xlu0 0
    %424 = vperm.xlu0 %423, %v52
    %v425 = vpop.permute.xlu0 %424
    %428 = vset.pattern.permute.xlu0 0
    %429 = vperm.xlu0 %428, %v53
    %v430 = vpop.permute.xlu0 %429
    %433 = vset.pattern.permute.xlu0 0
    %434 = vperm.xlu0 %433, %v54
    %v435 = vpop.permute.xlu0 %434
    %438 = vset.pattern.permute.xlu0 0
    %439 = vperm.xlu0 %438, %v55
    %v440 = vpop.permute.xlu0 %439
    %443 = vset.pattern.permute.xlu0 0
    %444 = vperm.xlu0 %443, %v56
    %v445 = vpop.permute.xlu0 %444
    %448 = vset.pattern.permute.xlu0 0
    %449 = vperm.xlu0 %448, %v57
    %v450 = vpop.permute.xlu0 %449
    %453 = vset.pattern.permute.xlu0 0
    %454 = vperm.xlu0 %453, %v58
    %v455 = vpop.permute.xlu0 %454
    %458 = vset.pattern.permute.xlu0 0
    %459 = vperm.xlu0 %458, %v59
    %v460 = vpop.permute.xlu0 %459
    %v478 = vunpack.c.l.b16 %v36
    %v479 = vunpack.c.h.b16 %v36
    %v480 = vunpack.c.l.b16 %v37
    %v481 = vunpack.c.l.b16 %v38
    %v482 = vunpack.c.h.b16 %v38
    %v483 = vunpack.c.l.b16 %v39
    %v484 = vunpack.c.l.b16 %v40
    %v485 = vunpack.c.h.b16 %v40
    %v486 = vunpack.c.l.b16 %v41
    %v487 = vunpack.c.l.b16 %v42
    %v488 = vunpack.c.h.b16 %v42
    %v489 = vunpack.c.l.b16 %v43
    %v490 = vunpack.c.l.b16 %v44
    %v491 = vunpack.c.h.b16 %v44
    %v492 = vunpack.c.l.b16 %v45
    %v493 = vunpack.c.l.b16 %v46
    %v494 = vunpack.c.h.b16 %v46
    %v495 = vunpack.c.l.b16 %v47
    %v496 = vunpack.c.l.b16 %v48
    %v497 = vunpack.c.h.b16 %v48
    %v498 = vunpack.c.l.b16 %v49
    %v499 = vunpack.c.l.b16 %v50
    %v500 = vunpack.c.h.b16 %v50
    %v501 = vunpack.c.l.b16 %v51
    %v502 = vpack.c.b16 %v481, %v478
    %v503 = vpack.c.b16 %v482, %v479
    %v504 = vpack.c.b16 %v483, %v480
    %v505 = vpack.c.b16 %v487, %v484
    %v506 = vpack.c.b16 %v488, %v485
    %v507 = vpack.c.b16 %v489, %v486
    %v508 = vpack.c.b16 %v493, %v490
    %v509 = vpack.c.b16 %v494, %v491
    %v510 = vpack.c.b16 %v495, %v492
    %v511 = vpack.c.b16 %v499, %v496
    %v512 = vpack.c.b16 %v500, %v497
    %v513 = vpack.c.b16 %v501, %v498
    %vm522 = vcmask 261120
    %v524 = vsel %vm522, %v504, 0
    %v527 = vsel %vm522, %v507, 0
    %v530 = vsel %vm522, %v510, 0
    %v533 = vsel %vm522, %v513, 0
    %535 = vmatprep.subr.bf16.mxu0 %v159
    %536 = vmatpush1.bf16.msra.mxu0 %v158
    %537 = vmatprep.subr.bf16.mxu0 %v161
    %538 = vmatpush1.bf16.msra.mxu0 %v160
    %539 = vmatprep.subr.bf16.mxu0 %v259
    %540 = vmatpush1.bf16.msra.mxu0 %v258
    %541 = vmatprep.subr.bf16.mxu0 %v261
    %542 = vmatpush1.bf16.msra.mxu0 %v260
    %543 = vmatprep.subr.bf16.mxu0 %v286
    %544 = vmatpush1.bf16.msra.mxu0 %v285
    %545 = vmatprep.subr.bf16.mxu0 %v288
    %546 = vmatpush1.bf16.msra.mxu0 %v287
    %547 = vmatprep.subr.bf16.mxu0 %v313
    %548 = vmatpush1.bf16.msra.mxu0 %v312
    %549 = vmatprep.subr.bf16.mxu0 %v315
    %550 = vmatpush1.bf16.msra.mxu0 %v314
    %551 = vmatprep.subr.bf16.mxu0 %v124
    %552 = vmatpush1.bf16.msra.mxu0 %v123
    %553 = vmatprep.subr.bf16.mxu0 %v126
    %554 = vmatpush1.bf16.msra.mxu0 %v125
    %555 = vmatprep.subr.bf16.mxu0 %v340
    %556 = vmatpush1.bf16.msra.mxu0 %v339
    %557 = vmatprep.subr.bf16.mxu0 %v342
    %558 = vmatpush1.bf16.msra.mxu0 %v341
    %559 = vmatprep.subr.bf16.mxu0 %v367
    %560 = vmatpush1.bf16.msra.mxu0 %v366
    %561 = vmatprep.subr.bf16.mxu0 %v369
    %562 = vmatpush1.bf16.msra.mxu0 %v368
    %563 = vmatprep.subr.bf16.mxu0 %v388
    %564 = vmatpush1.bf16.msra.mxu0 %v387
    %565 = vmatprep.subr.bf16.mxu0 %v390
    %566 = vmatpush1.bf16.msra.mxu0 %v389
    %567 = vmatprep.mubr.bf16.mxu0 %v503
    %568 = vmatmul.mubr.bf16.gmra.mrb[0].mxu0 %v502
    %v569 = vpop.f32.mrb[0].mxu0
    %v570 = vadd.f32 %v425, %v569
    %v571 = vpop.f32.mrb[0].mxu0
    %v572 = vadd.f32 %v425, %v571
    %v573 = vpop.f32.mrb[0].mxu0
    %v574 = vadd.f32 %v430, %v573
    %v575 = vpop.f32.mrb[0].mxu0
    %v576 = vadd.f32 %v430, %v575
    %577 = vmatprep.mubr.bf16.mxu0 %v506
    %578 = vmatmul.mubr.bf16.gmra.mrb[0].mxu0 %v505
    %v579 = vpop.f32.mrb[0].mxu0
    %v580 = vadd.f32 %v435, %v579
    %v581 = vpop.f32.mrb[0].mxu0
    %v582 = vadd.f32 %v435, %v581
    %v583 = vpop.f32.mrb[0].mxu0
    %v584 = vadd.f32 %v440, %v583
    %v585 = vpop.f32.mrb[0].mxu0
    %v586 = vadd.f32 %v440, %v585
    %587 = vmatprep.mubr.bf16.mxu0 %v509
    %588 = vmatmul.mubr.bf16.gmra.mrb[0].mxu0 %v508
    %v589 = vpop.f32.mrb[0].mxu0
    %v590 = vadd.f32 %v445, %v589
    %v591 = vpop.f32.mrb[0].mxu0
    %v592 = vadd.f32 %v445, %v591
    %v593 = vpop.f32.mrb[0].mxu0
    %v594 = vadd.f32 %v450, %v593
    %v595 = vpop.f32.mrb[0].mxu0
    %v596 = vadd.f32 %v450, %v595
    %597 = vmatprep.mubr.bf16.mxu0 %v512
    %598 = vmatmul.mubr.bf16.gmra.mrb[0].mxu0 %v511
    %v599 = vpop.f32.mrb[0].mxu0
    %v600 = vadd.f32 %v455, %v599
    %v601 = vpop.f32.mrb[0].mxu0
    %v602 = vadd.f32 %v455, %v601
    %v603 = vpop.f32.mrb[0].mxu0
    %v604 = vadd.f32 %v460, %v603
    %v605 = vpop.f32.mrb[0].mxu0
    %v606 = vadd.f32 %v460, %v605
    %607 = vdwg.mxu0
    %608 = vmatprep.subr.bf16.mxu0 %v415
    %609 = vmatpush1.bf16.msra.mxu0 %v414
    %610 = vmatprep.subr.bf16.mxu0 %v417
    %611 = vmatpush1.bf16.msra.mxu0 %v416
    %612 = vmatprep.subr.bf16.mxu0 0
    %613 = vmatpush1.bf16.msra.mxu0 0
    %614 = vmatprep.subr.bf16.mxu0 0
    %615 = vmatpush1.bf16.msra.mxu0 0
    %616 = vmatprep.subr.bf16.mxu0 0
    %617 = vmatpush1.bf16.msra.mxu0 0
    %618 = vmatprep.subr.bf16.mxu0 0
    %619 = vmatpush1.bf16.msra.mxu0 0
    %620 = vmatprep.subr.bf16.mxu0 0
    %621 = vmatpush1.bf16.msra.mxu0 0
    %622 = vmatprep.subr.bf16.mxu0 0
    %623 = vmatpush1.bf16.msra.mxu0 0
    %624 = vmatprep.subr.bf16.mxu0 0
    %625 = vmatpush1.bf16.msra.mxu0 0
    %626 = vmatprep.subr.bf16.mxu0 0
    %627 = vmatpush1.bf16.msra.mxu0 0
    %628 = vmatprep.subr.bf16.mxu0 0
    %629 = vmatpush1.bf16.msra.mxu0 0
    %630 = vmatprep.subr.bf16.mxu0 0
    %631 = vmatpush1.bf16.msra.mxu0 0
    %632 = vmatprep.subr.bf16.mxu0 0
    %633 = vmatpush1.bf16.msra.mxu0 0
    %634 = vmatprep.subr.bf16.mxu0 0
    %635 = vmatpush1.bf16.msra.mxu0 0
    %636 = vmatprep.subr.bf16.mxu0 0
    %637 = vmatpush1.bf16.msra.mxu0 0
    %638 = vmatprep.subr.bf16.mxu0 0
    %639 = vmatpush1.bf16.msra.mxu0 0
    %640 = vmatprep.mubr.bf16.mxu0 0
    %641 = vmatmul.mubr.bf16.gmra.mrb[0].mxu0 %v524
    %v642 = vpop.f32.mrb[0].mxu0
    %v643 = vadd.f32 %v570, %v642
    %v644 = vpop.f32.mrb[0].mxu0
    %v645 = vadd.f32 %v572, %v644
    %v646 = vpop.f32.mrb[0].mxu0
    %v647 = vadd.f32 %v574, %v646
    %v648 = vpop.f32.mrb[0].mxu0
    %v649 = vadd.f32 %v576, %v648
    %650 = vmatprep.mubr.bf16.mxu0 0
    %651 = vmatmul.mubr.bf16.gmra.mrb[0].mxu0 %v527
    %v652 = vpop.f32.mrb[0].mxu0
    %v653 = vadd.f32 %v580, %v652
    %v654 = vpop.f32.mrb[0].mxu0
    %v655 = vadd.f32 %v582, %v654
    %v656 = vpop.f32.mrb[0].mxu0
    %v657 = vadd.f32 %v584, %v656
    %v658 = vpop.f32.mrb[0].mxu0
    %v659 = vadd.f32 %v586, %v658
    %660 = vmatprep.mubr.bf16.mxu0 0
    %661 = vmatmul.mubr.bf16.gmra.mrb[0].mxu0 %v530
    %v662 = vpop.f32.mrb[0].mxu0
    %v663 = vadd.f32 %v590, %v662
    %v664 = vpop.f32.mrb[0].mxu0
    %v665 = vadd.f32 %v592, %v664
    %v666 = vpop.f32.mrb[0].mxu0
    %v667 = vadd.f32 %v594, %v666
    %v668 = vpop.f32.mrb[0].mxu0
    %v669 = vadd.f32 %v596, %v668
    %670 = vmatprep.mubr.bf16.mxu0 0
    %671 = vmatmul.mubr.bf16.gmra.mrb[0].mxu0 %v533
    %v672 = vpop.f32.mrb[0].mxu0
    %v673 = vadd.f32 %v600, %v672
    %v674 = vpop.f32.mrb[0].mxu0
    %v675 = vadd.f32 %v602, %v674
    %v676 = vpop.f32.mrb[0].mxu0
    %v677 = vadd.f32 %v604, %v676
    %v678 = vpop.f32.mrb[0].mxu0
    %v679 = vadd.f32 %v606, %v678
    %680 = vdwg.mxu0
    %v681 = vmul.f32 %v643, 0.5
    %v682 = vmul.f32 %v645, 0.5
    %v683 = vmul.f32 %v647, 0.5
    %v684 = vmul.f32 %v649, 0.5
    %v685 = vmul.f32 %v653, 0.5
    %v686 = vmul.f32 %v655, 0.5
    %v687 = vmul.f32 %v657, 0.5
    %v688 = vmul.f32 %v659, 0.5
    %v689 = vtanh.pop %v681
    %v690 = vtanh.pop %v682
    %v691 = vtanh.pop %v683
    %v692 = vtanh.pop %v684
    %v693 = vtanh.pop %v685
    %v694 = vtanh.pop %v686
    %v695 = vtanh.pop %v687
    %v696 = vtanh.pop %v688
    %v697 = vmul.f32 %v689, 0.6
    %v698 = vmul.f32 %v690, 0.6
    %v699 = vmul.f32 %v691, 0.6
    %v700 = vmul.f32 %v692, 0.6
    %v701 = vmul.f32 %v693, 0.6
    %v702 = vmul.f32 %v694, 0.6
    %v703 = vmul.f32 %v695, 0.6
    %v704 = vmul.f32 %v696, 0.6
    %v705 = vadd.f32 %v697, 0.5
    %v706 = vadd.f32 %v698, 0.5
    %v707 = vadd.f32 %v699, 0.5
    %v708 = vadd.f32 %v700, 0.5
    %v709 = vadd.f32 %v701, 0.5
    %v710 = vadd.f32 %v702, 0.5
    %v711 = vadd.f32 %v703, 0.5
    %v712 = vadd.f32 %v704, 0.5
    %v713 = vmax.f32 %v705, 0.0
    %v714 = vmax.f32 %v706, 0.0
    %v715 = vmax.f32 %v707, 0.0
    %v716 = vmax.f32 %v708, 0.0
    %v717 = vmax.f32 %v709, 0.0
    %v718 = vmax.f32 %v710, 0.0
    %v719 = vmax.f32 %v711, 0.0
    %v720 = vmax.f32 %v712, 0.0
    %v721 = vmin.f32 %v713, 1.0
    %v722 = vmin.f32 %v714, 1.0
    %v723 = vmin.f32 %v715, 1.0
    %v724 = vmin.f32 %v716, 1.0
    %v725 = vmin.f32 %v717, 1.0
    %v726 = vmin.f32 %v718, 1.0
    %v727 = vmin.f32 %v719, 1.0
    %v728 = vmin.f32 %v720, 1.0
    %v729 = vmul.f32 %v663, 0.5
    %v730 = vmul.f32 %v665, 0.5
    %v731 = vmul.f32 %v667, 0.5
    %v732 = vmul.f32 %v669, 0.5
    %v733 = vmul.f32 %v673, 0.5
    %v734 = vmul.f32 %v675, 0.5
    %v735 = vmul.f32 %v677, 0.5
    %v736 = vmul.f32 %v679, 0.5
    %v737 = vtanh.pop %v729
    %v738 = vtanh.pop %v730
    %v739 = vtanh.pop %v731
    %v740 = vtanh.pop %v732
    %v741 = vtanh.pop %v733
    %v742 = vtanh.pop %v734
    %v743 = vtanh.pop %v735
    %v744 = vtanh.pop %v736
    %v745 = vmul.f32 %v737, 0.6
    %v746 = vmul.f32 %v738, 0.6
    %v747 = vmul.f32 %v739, 0.6
    %v748 = vmul.f32 %v740, 0.6
    %v749 = vmul.f32 %v741, 0.6
    %v750 = vmul.f32 %v742, 0.6
    %v751 = vmul.f32 %v743, 0.6
    %v752 = vmul.f32 %v744, 0.6
    %v753 = vadd.f32 %v745, 0.5
    %v754 = vadd.f32 %v746, 0.5
    %v755 = vadd.f32 %v747, 0.5
    %v756 = vadd.f32 %v748, 0.5
    %v757 = vadd.f32 %v749, 0.5
    %v758 = vadd.f32 %v750, 0.5
    %v759 = vadd.f32 %v751, 0.5
    %v760 = vadd.f32 %v752, 0.5
    %v761 = vmax.f32 %v753, 0.0
    %v762 = vmax.f32 %v754, 0.0
    %v763 = vmax.f32 %v755, 0.0
    %v764 = vmax.f32 %v756, 0.0
    %v765 = vmax.f32 %v757, 0.0
    %v766 = vmax.f32 %v758, 0.0
    %v767 = vmax.f32 %v759, 0.0
    %v768 = vmax.f32 %v760, 0.0
    %v769 = vmin.f32 %v761, 1.0
    %v770 = vmin.f32 %v762, 1.0
    %v771 = vmin.f32 %v763, 1.0
    %v772 = vmin.f32 %v764, 1.0
    %v773 = vmin.f32 %v765, 1.0
    %v774 = vmin.f32 %v766, 1.0
    %v775 = vmin.f32 %v767, 1.0
    %v776 = vmin.f32 %v768, 1.0
    %v777 = vpack.c.bf16 %v771, %v769
    %v778 = vpack.c.bf16 %v772, %v770
    %v779 = vpack.c.bf16 %v775, %v773
    %v780 = vpack.c.bf16 %v776, %v774
    %v781 = vmul.bf16 %v123, %v777
    %v782 = vmul.bf16 %v124, %v778
    %v783 = vmul.bf16 %v125, %v779
    %v784 = vmul.bf16 %v126, %v780
    %789 = vrot.lane.b32.xlu0 %v781, 17
    %v790 = vpop.permute.xlu0 %789
    %791 = vrot.lane.b32.xlu0 %v782, 17
    %v792 = vpop.permute.xlu0 %791
    %793 = vrot.lane.b32.xlu0 %v783, 17
    %v794 = vpop.permute.xlu0 %793
    %795 = vrot.lane.b32.xlu0 %v784, 17
    %v796 = vpop.permute.xlu0 %795
    %v797 = vsel %vm139, %v790, %v792
    %v798 = vsel %vm139, %v794, %v796
    %v802 = vsel %vm144, 0, %v790
    %v805 = vsel %vm144, 0, %v794
    %v808 = vsel %vm144, %v792, 0
    %v811 = vsel %vm144, %v796, 0
    %v813 = vmul.bf16 %v802, %v105
    %v814 = vmul.bf16 %v797, %v106
    %v815 = vmul.bf16 %v805, %v105
    %v816 = vmul.bf16 %v798, %v106
    %v817 = vmul.bf16 %v802, %v165
    %v818 = vmul.bf16 %v797, %v169
    %v819 = vmul.bf16 %v808, %v167
    %v820 = vmul.bf16 %v805, %v165
    %v821 = vmul.bf16 %v798, %v169
    %v822 = vmul.bf16 %v811, %v167
    %v823 = vmul.bf16 %v802, %v182
    %v824 = vmul.bf16 %v797, %v186
    %v825 = vmul.bf16 %v808, %v184
    %v826 = vmul.bf16 %v805, %v182
    %v827 = vmul.bf16 %v798, %v186
    %v828 = vmul.bf16 %v811, %v184
    %v829 = vmul.bf16 %v802, %v197
    %v830 = vmul.bf16 %v797, %v201
    %v831 = vmul.bf16 %v808, %v199
    %v832 = vmul.bf16 %v805, %v197
    %v833 = vmul.bf16 %v798, %v201
    %v834 = vmul.bf16 %v811, %v199
    %v835 = vmul.bf16 %v802, %v212
    %v836 = vmul.bf16 %v797, %v216
    %v837 = vmul.bf16 %v808, %v214
    %v838 = vmul.bf16 %v805, %v212
    %v839 = vmul.bf16 %v798, %v216
    %v840 = vmul.bf16 %v811, %v214
    %v841 = vmul.bf16 %v802, %v227
    %v842 = vmul.bf16 %v797, %v231
    %v843 = vmul.bf16 %v808, %v229
    %v844 = vmul.bf16 %v805, %v227
    %v845 = vmul.bf16 %v798, %v231
    %v846 = vmul.bf16 %v811, %v229
    %851 = vrot.lane.b32.xlu0 %v802, 127
    %v852 = vpop.permute.xlu0 %851
    %853 = vrot.lane.b32.xlu0 %v797, 127
    %v854 = vpop.permute.xlu0 %853
    %855 = vrot.lane.b32.xlu0 %v808, 127
    %v856 = vpop.permute.xlu0 %855
    %857 = vrot.lane.b32.xlu0 %v805, 127
    %v858 = vpop.permute.xlu0 %857
    %859 = vrot.lane.b32.xlu0 %v798, 127
    %v860 = vpop.permute.xlu0 %859
    %861 = vrot.lane.b32.xlu0 %v811, 127
    %v862 = vpop.permute.xlu0 %861
    %v863 = vsel %vm257, %v852, %v854
    %v864 = vsel %vm257, %v854, %v856
    %v865 = vsel %vm257, %v858, %v860
    %v866 = vsel %vm257, %v860, %v862
    %877 = vrot.lane.b32.xlu0 %v817, 126
    %v878 = vpop.permute.xlu0 %877
    %879 = vrot.lane.b32.xlu0 %v818, 126
    %v880 = vpop.permute.xlu0 %879
    %881 = vrot.lane.b32.xlu0 %v819, 126
    %v882 = vpop.permute.xlu0 %881
    %883 = vrot.lane.b32.xlu0 %v820, 126
    %v884 = vpop.permute.xlu0 %883
    %885 = vrot.lane.b32.xlu0 %v821, 126
    %v886 = vpop.permute.xlu0 %885
    %887 = vrot.lane.b32.xlu0 %v822, 126
    %v888 = vpop.permute.xlu0 %887
    %v889 = vsel %vm284, %v878, %v880
    %v890 = vsel %vm284, %v880, %v882
    %v891 = vsel %vm284, %v884, %v886
    %v892 = vsel %vm284, %v886, %v888
    %903 = vrot.lane.b32.xlu0 %v823, 112
    %v904 = vpop.permute.xlu0 %903
    %905 = vrot.lane.b32.xlu0 %v824, 112
    %v906 = vpop.permute.xlu0 %905
    %907 = vrot.lane.b32.xlu0 %v825, 112
    %v908 = vpop.permute.xlu0 %907
    %909 = vrot.lane.b32.xlu0 %v826, 112
    %v910 = vpop.permute.xlu0 %909
    %911 = vrot.lane.b32.xlu0 %v827, 112
    %v912 = vpop.permute.xlu0 %911
    %913 = vrot.lane.b32.xlu0 %v828, 112
    %v914 = vpop.permute.xlu0 %913
    %v915 = vsel %vm311, %v904, %v906
    %v916 = vsel %vm311, %v906, %v908
    %v917 = vsel %vm311, %v910, %v912
    %v918 = vsel %vm311, %v912, %v914
    %929 = vrot.lane.b32.xlu0 %v829, 110
    %v930 = vpop.permute.xlu0 %929
    %931 = vrot.lane.b32.xlu0 %v830, 110
    %v932 = vpop.permute.xlu0 %931
    %933 = vrot.lane.b32.xlu0 %v831, 110
    %v934 = vpop.permute.xlu0 %933
    %935 = vrot.lane.b32.xlu0 %v832, 110
    %v936 = vpop.permute.xlu0 %935
    %937 = vrot.lane.b32.xlu0 %v833, 110
    %v938 = vpop.permute.xlu0 %937
    %939 = vrot.lane.b32.xlu0 %v834, 110
    %v940 = vpop.permute.xlu0 %939
    %v941 = vsel %vm338, %v930, %v932
    %v942 = vsel %vm338, %v932, %v934
    %v943 = vsel %vm338, %v936, %v938
    %v944 = vsel %vm338, %v938, %v940
    %955 = vrot.lane.b32.xlu0 %v835, 96
    %v956 = vpop.permute.xlu0 %955
    %957 = vrot.lane.b32.xlu0 %v836, 96
    %v958 = vpop.permute.xlu0 %957
    %959 = vrot.lane.b32.xlu0 %v837, 96
    %v960 = vpop.permute.xlu0 %959
    %961 = vrot.lane.b32.xlu0 %v838, 96
    %v962 = vpop.permute.xlu0 %961
    %963 = vrot.lane.b32.xlu0 %v839, 96
    %v964 = vpop.permute.xlu0 %963
    %965 = vrot.lane.b32.xlu0 %v840, 96
    %v966 = vpop.permute.xlu0 %965
    %v967 = vsel %vm365, %v956, %v958
    %v968 = vsel %vm365, %v958, %v960
    %v969 = vsel %vm365, %v962, %v964
    %v970 = vsel %vm365, %v964, %v966
    %975 = vrot.lane.b32.xlu0 %v802, 95
    %v976 = vpop.permute.xlu0 %975
    %977 = vrot.lane.b32.xlu0 %v797, 95
    %v978 = vpop.permute.xlu0 %977
    %979 = vrot.lane.b32.xlu0 %v808, 95
    %v980 = vpop.permute.xlu0 %979
    %981 = vrot.lane.b32.xlu0 %v805, 95
    %v982 = vpop.permute.xlu0 %981
    %983 = vrot.lane.b32.xlu0 %v798, 95
    %v984 = vpop.permute.xlu0 %983
    %985 = vrot.lane.b32.xlu0 %v811, 95
    %v986 = vpop.permute.xlu0 %985
    %v987 = vsel %vm386, %v976, %v978
    %v988 = vsel %vm386, %v978, %v980
    %v989 = vsel %vm386, %v982, %v984
    %v990 = vsel %vm386, %v984, %v986
    %1001 = vrot.lane.b32.xlu0 %v841, 94
    %v1002 = vpop.permute.xlu0 %1001
    %1003 = vrot.lane.b32.xlu0 %v842, 94
    %v1004 = vpop.permute.xlu0 %1003
    %1005 = vrot.lane.b32.xlu0 %v843, 94
    %v1006 = vpop.permute.xlu0 %1005
    %1007 = vrot.lane.b32.xlu0 %v844, 94
    %v1008 = vpop.permute.xlu0 %1007
    %1009 = vrot.lane.b32.xlu0 %v845, 94
    %v1010 = vpop.permute.xlu0 %1009
    %1011 = vrot.lane.b32.xlu0 %v846, 94
    %v1012 = vpop.permute.xlu0 %1011
    %v1013 = vsel %vm413, %v1002, %v1004
    %v1014 = vsel %vm413, %v1004, %v1006
    %v1015 = vsel %vm413, %v1008, %v1010
    %v1016 = vsel %vm413, %v1010, %v1012
    %1022 = vset.pattern.permute.xlu0 0
    %1023 = vperm.xlu0 %1022, %v68
    %v1024 = vpop.permute.xlu0 %1023
    %1027 = vset.pattern.permute.xlu0 0
    %1028 = vperm.xlu0 %1027, %v69
    %v1029 = vpop.permute.xlu0 %1028
    %1032 = vset.pattern.permute.xlu0 0
    %1033 = vperm.xlu0 %1032, %v70
    %v1034 = vpop.permute.xlu0 %1033
    %1037 = vset.pattern.permute.xlu0 0
    %1038 = vperm.xlu0 %1037, %v71
    %v1039 = vpop.permute.xlu0 %1038
    %v1049 = vunpack.c.l.b16 %v60
    %v1050 = vunpack.c.h.b16 %v60
    %v1051 = vunpack.c.l.b16 %v61
    %v1052 = vunpack.c.l.b16 %v62
    %v1053 = vunpack.c.h.b16 %v62
    %v1054 = vunpack.c.l.b16 %v63
    %v1055 = vunpack.c.l.b16 %v64
    %v1056 = vunpack.c.h.b16 %v64
    %v1057 = vunpack.c.l.b16 %v65
    %v1058 = vunpack.c.l.b16 %v66
    %v1059 = vunpack.c.h.b16 %v66
    %v1060 = vunpack.c.l.b16 %v67
    %v1061 = vpack.c.b16 %v1052, %v1049
    %v1062 = vpack.c.b16 %v1053, %v1050
    %v1063 = vpack.c.b16 %v1054, %v1051
    %v1064 = vpack.c.b16 %v1058, %v1055
    %v1065 = vpack.c.b16 %v1059, %v1056
    %v1066 = vpack.c.b16 %v1060, %v1057
    %v1072 = vsel %vm522, %v1063, 0
    %v1075 = vsel %vm522, %v1066, 0
    %1077 = vmatprep.subr.bf16.mxu0 %v814
    %1078 = vmatpush1.bf16.msra.mxu0 %v813
    %1079 = vmatprep.subr.bf16.mxu0 %v816
    %1080 = vmatpush1.bf16.msra.mxu0 %v815
    %1081 = vmatprep.subr.bf16.mxu0 %v864
    %1082 = vmatpush1.bf16.msra.mxu0 %v863
    %1083 = vmatprep.subr.bf16.mxu0 %v866
    %1084 = vmatpush1.bf16.msra.mxu0 %v865
    %1085 = vmatprep.subr.bf16.mxu0 %v890
    %1086 = vmatpush1.bf16.msra.mxu0 %v889
    %1087 = vmatprep.subr.bf16.mxu0 %v892
    %1088 = vmatpush1.bf16.msra.mxu0 %v891
    %1089 = vmatprep.subr.bf16.mxu0 %v916
    %1090 = vmatpush1.bf16.msra.mxu0 %v915
    %1091 = vmatprep.subr.bf16.mxu0 %v918
    %1092 = vmatpush1.bf16.msra.mxu0 %v917
    %1093 = vmatprep.subr.bf16.mxu0 %v782
    %1094 = vmatpush1.bf16.msra.mxu0 %v781
    %1095 = vmatprep.subr.bf16.mxu0 %v784
    %1096 = vmatpush1.bf16.msra.mxu0 %v783
    %1097 = vmatprep.subr.bf16.mxu0 %v942
    %1098 = vmatpush1.bf16.msra.mxu0 %v941
    %1099 = vmatprep.subr.bf16.mxu0 %v944
    %1100 = vmatpush1.bf16.msra.mxu0 %v943
    %1101 = vmatprep.subr.bf16.mxu0 %v968
    %1102 = vmatpush1.bf16.msra.mxu0 %v967
    %1103 = vmatprep.subr.bf16.mxu0 %v970
    %1104 = vmatpush1.bf16.msra.mxu0 %v969
    %1105 = vmatprep.subr.bf16.mxu0 %v988
    %1106 = vmatpush1.bf16.msra.mxu0 %v987
    %1107 = vmatprep.subr.bf16.mxu0 %v990
    %1108 = vmatpush1.bf16.msra.mxu0 %v989
    %1109 = vmatprep.mubr.bf16.mxu0 %v1062
    %1110 = vmatmul.mubr.bf16.gmra.mrb[0].mxu0 %v1061
    %v1111 = vpop.f32.mrb[0].mxu0
    %v1112 = vadd.f32 %v1024, %v1111
    %v1113 = vpop.f32.mrb[0].mxu0
    %v1114 = vadd.f32 %v1024, %v1113
    %v1115 = vpop.f32.mrb[0].mxu0
    %v1116 = vadd.f32 %v1029, %v1115
    %v1117 = vpop.f32.mrb[0].mxu0
    %v1118 = vadd.f32 %v1029, %v1117
    %1119 = vmatprep.mubr.bf16.mxu0 %v1065
    %1120 = vmatmul.mubr.bf16.gmra.mrb[0].mxu0 %v1064
    %v1121 = vpop.f32.mrb[0].mxu0
    %v1122 = vadd.f32 %v1034, %v1121
    %v1123 = vpop.f32.mrb[0].mxu0
    %v1124 = vadd.f32 %v1034, %v1123
    %v1125 = vpop.f32.mrb[0].mxu0
    %v1126 = vadd.f32 %v1039, %v1125
    %v1127 = vpop.f32.mrb[0].mxu0
    %v1128 = vadd.f32 %v1039, %v1127
    %1129 = vdwg.mxu0
    %1130 = vmatprep.subr.bf16.mxu0 %v1014
    %1131 = vmatpush1.bf16.msra.mxu0 %v1013
    %1132 = vmatprep.subr.bf16.mxu0 %v1016
    %1133 = vmatpush1.bf16.msra.mxu0 %v1015
    %1134 = vmatprep.subr.bf16.mxu0 0
    %1135 = vmatpush1.bf16.msra.mxu0 0
    %1136 = vmatprep.subr.bf16.mxu0 0
    %1137 = vmatpush1.bf16.msra.mxu0 0
    %1138 = vmatprep.subr.bf16.mxu0 0
    %1139 = vmatpush1.bf16.msra.mxu0 0
    %1140 = vmatprep.subr.bf16.mxu0 0
    %1141 = vmatpush1.bf16.msra.mxu0 0
    %1142 = vmatprep.subr.bf16.mxu0 0
    %1143 = vmatpush1.bf16.msra.mxu0 0
    %1144 = vmatprep.subr.bf16.mxu0 0
    %1145 = vmatpush1.bf16.msra.mxu0 0
    %1146 = vmatprep.subr.bf16.mxu0 0
    %1147 = vmatpush1.bf16.msra.mxu0 0
    %1148 = vmatprep.subr.bf16.mxu0 0
    %1149 = vmatpush1.bf16.msra.mxu0 0
    %1150 = vmatprep.subr.bf16.mxu0 0
    %1151 = vmatpush1.bf16.msra.mxu0 0
    %1152 = vmatprep.subr.bf16.mxu0 0
    %1153 = vmatpush1.bf16.msra.mxu0 0
    %1154 = vmatprep.subr.bf16.mxu0 0
    %1155 = vmatpush1.bf16.msra.mxu0 0
    %1156 = vmatprep.subr.bf16.mxu0 0
    %1157 = vmatpush1.bf16.msra.mxu0 0
    %1158 = vmatprep.subr.bf16.mxu0 0
    %1159 = vmatpush1.bf16.msra.mxu0 0
    %1160 = vmatprep.subr.bf16.mxu0 0
    %1161 = vmatpush1.bf16.msra.mxu0 0
    %1162 = vmatprep.mubr.bf16.mxu0 0
    %1163 = vmatmul.mubr.bf16.gmra.mrb[0].mxu0 %v1072
    %v1164 = vpop.f32.mrb[0].mxu0
    %v1165 = vadd.f32 %v1112, %v1164
    %v1166 = vpop.f32.mrb[0].mxu0
    %v1167 = vadd.f32 %v1114, %v1166
    %v1168 = vpop.f32.mrb[0].mxu0
    %v1169 = vadd.f32 %v1116, %v1168
    %v1170 = vpop.f32.mrb[0].mxu0
    %v1171 = vadd.f32 %v1118, %v1170
    %1172 = vmatprep.mubr.bf16.mxu0 0
    %1173 = vmatmul.mubr.bf16.gmra.mrb[0].mxu0 %v1075
    %v1174 = vpop.f32.mrb[0].mxu0
    %v1175 = vadd.f32 %v1122, %v1174
    %v1176 = vpop.f32.mrb[0].mxu0
    %v1177 = vadd.f32 %v1124, %v1176
    %v1178 = vpop.f32.mrb[0].mxu0
    %v1179 = vadd.f32 %v1126, %v1178
    %v1180 = vpop.f32.mrb[0].mxu0
    %v1181 = vadd.f32 %v1128, %v1180
    %1182 = vdwg.mxu0
    %v1183 = vmul.f32 %v721, %v115
    %v1184 = vmul.f32 %v722, %v116
    %v1185 = vmul.f32 %v723, %v117
    %v1186 = vmul.f32 %v724, %v118
    %v1187 = vmul.f32 %v725, %v119
    %v1188 = vmul.f32 %v726, %v120
    %v1189 = vmul.f32 %v727, %v121
    %v1190 = vmul.f32 %v728, %v122
    %v1191 = vsub.f32 1.0, %v721
    %v1192 = vsub.f32 1.0, %v722
    %v1193 = vsub.f32 1.0, %v723
    %v1194 = vsub.f32 1.0, %v724
    %v1195 = vsub.f32 1.0, %v725
    %v1196 = vsub.f32 1.0, %v726
    %v1197 = vsub.f32 1.0, %v727
    %v1198 = vsub.f32 1.0, %v728
    %v1199 = vtanh.pop %v1165
    %v1200 = vtanh.pop %v1167
    %v1201 = vtanh.pop %v1169
    %v1202 = vtanh.pop %v1171
    %v1203 = vtanh.pop %v1175
    %v1204 = vtanh.pop %v1177
    %v1205 = vtanh.pop %v1179
    %v1206 = vtanh.pop %v1181
    %v1207 = vmul.f32 %v1191, %v1199
    %v1208 = vmul.f32 %v1192, %v1200
    %v1209 = vmul.f32 %v1193, %v1201
    %v1210 = vmul.f32 %v1194, %v1202
    %v1211 = vmul.f32 %v1195, %v1203
    %v1212 = vmul.f32 %v1196, %v1204
    %v1213 = vmul.f32 %v1197, %v1205
    %v1214 = vmul.f32 %v1198, %v1206
    %v1215 = vadd.f32 %v1183, %v1207
    %v1216 = vadd.f32 %v1184, %v1208
    %v1217 = vadd.f32 %v1185, %v1209
    %v1218 = vadd.f32 %v1186, %v1210
    %v1219 = vadd.f32 %v1187, %v1211
    %v1220 = vadd.f32 %v1188, %v1212
    %v1221 = vadd.f32 %v1189, %v1213
    %v1222 = vadd.f32 %v1190, %v1214
    %1223 = vst [vmem:[#allocation5] sm:$0xff] %v1215
    %1224 = vst [vmem:[#allocation5 + $0x8] sm:$0xff] %v1216
    %1225 = vst [vmem:[#allocation5 + $0x10] sm:$0xff] %v1217
    %1226 = vst [vmem:[#allocation5 + $0x18] sm:$0xff] %v1218
    %1227 = vst [vmem:[#allocation5 + $0x20] sm:$0xff] %v1219
    %1228 = vst [vmem:[#allocation5 + $0x28] sm:$0xff] %v1220
    %1229 = vst [vmem:[#allocation5 + $0x30] sm:$0xff] %v1221
    %1230 = vst [vmem:[#allocation5 + $0x38] sm:$0xff] %v1222
    // Predicated region
    $region26: #{tpu_custom_call.1} parent=1 // pred_check
      _
    $region27: #{tpu_custom_call.1} parent=1 // pred_check_branch
      %1232 = sbr.rel (0) target = $region29
    $region28: #{tpu_custom_call.1} parent=1 // pred_region
      %s1234 = ssub.s32 1024, 1024
      %1235 = vsyncadd [#allocation4], %s1234
      %s1236 = sshll.u32 [#allocation5], 4
      %s1237 = int_to_ptr.vmem [resolvable:$true] %s1236
      %1242 = dma.vmem_to_hbm [thread:$0]  %s1237, 1024, %s5, [#allocation4], 256, 256, 16
    $region29: #{tpu_custom_call.1} parent=1 // pred_fallthru
      _
    // Predicated region
    $region30: #{tpu_custom_call.1} parent=1 // pred_check
      _
    $region31: #{tpu_custom_call.1} parent=1 // pred_check_branch
      %1244 = sbr.rel (0) target = $region33
    $region32: #{tpu_custom_call.1} parent=1 // pred_region
      %1245 = dma.done [#allocation4], 1024
    $region33: #{tpu_custom_call.1} parent=1 // pred_fallthru
      _
    %1246 = vsyncpa [#allocation3], 1
    %1247 = vsyncpa [#allocation4], 1

</llo_original>
